<compile_context>
chip_gen: v6e
topology: v6e:2x2x1
jax: 0.10.0
libtpu: 0.0.40
codegen_flags: <defaults>
</compile_context>

<pallas_src>
import functools

import jax
import jax.numpy as jnp
from jax import lax
from jax.experimental import pallas as pl
from jax.experimental.pallas import tpu as pltpu


def _round_up(x, m):
    return (x + m - 1) // m * m


# --------------------------------------------------------------------------- #
# Kernel 1: 'single' / 'nscaching_batch'  (one positive triple per batch row)
#   h, r, t : (Bp, Dp) pre-gathered embeddings, blocked TB rows per grid step.
#   out     : (Bp, 1) float32.
# --------------------------------------------------------------------------- #
def _single_kernel(h_ref, r_ref, t_ref, out_ref, *, gamma):
    h = h_ref[...].astype(jnp.float32)
    r = r_ref[...].astype(jnp.float32)
    t = t_ref[...].astype(jnp.float32)
    s = h + r - t                                    # left-assoc, like torch
    out_ref[...] = gamma - jnp.sum(jnp.abs(s), axis=-1, keepdims=True)


def transe_single_score(h, r, t, gamma):
    B, Dp = h.shape
    itemsize = jnp.dtype(h.dtype).itemsize
    # Pure HBM-bandwidth bound: pick the biggest batch tile whose pipelined
    # footprint (3 inputs x 2 buffers x TB x Dp) stays within ~24 MiB so it
    # also fits v7x's 64 MiB physical / 32 MiB scoped VMEM.
    budget = 24 * 1024 * 1024
    tb_cap = max(8, (budget // (3 * 2 * Dp * itemsize)) // 8 * 8)
    TB = int(min(1024, _round_up(B, 8), tb_cap))
    Bp = _round_up(B, TB)
    if Bp != B:
        pad = ((0, Bp - B), (0, 0))
        h = jnp.pad(h, pad)
        r = jnp.pad(r, pad)
        t = jnp.pad(t, pad)

    kernel = functools.partial(_single_kernel, gamma=float(gamma))
    out = pl.pallas_call(
        kernel,
        out_shape=jax.ShapeDtypeStruct((Bp, 1), jnp.float32),
        grid=(Bp // TB,),
        in_specs=[
            pl.BlockSpec((TB, Dp), lambda i: (i, 0)),
            pl.BlockSpec((TB, Dp), lambda i: (i, 0)),
            pl.BlockSpec((TB, Dp), lambda i: (i, 0)),
        ],
        out_specs=pl.BlockSpec((TB, 1), lambda i: (i, 0)),
        compiler_params=pltpu.CompilerParams(
            dimension_semantics=("parallel",),
            vmem_limit_bytes=32 * 1024 * 1024,
        ),
    )(h, r, t)
    return out[:B]


# --------------------------------------------------------------------------- #
# Kernel 2: 'head-batch' / 'tail-batch' with fused in-kernel gather.
#   ids_ref : (rows, Npad) int32 negative-entity ids (scalar-prefetched, SMEM)
#   base_ref: (TB, Dp)  f32    per-row base  (rel - tail  or  head + rel)
#   ent_ref : (E, Dp)          entity table, raw HBM ref (pl.ANY)
#   out_ref : (TB, TN)  f32    scores for this tile of negatives
#   gbuf    : (2, TB, TN, Dp)  double-buffered gather scratch (VMEM)
#   sem     : (2,) DMA semaphores, one per buffer slot
# --------------------------------------------------------------------------- #
_TB_NEG = 8   # batch rows scored per grid step (full (8,128) output tiles)


def _neg_kernel(ids_ref, base_ref, ent_ref, out_ref, gbuf, sem,
                *, head_batch, gamma, tn, tb):
    b = pl.program_id(0)
    j = pl.program_id(1)
    nt = pl.num_programs(1)
    slot = j & 1                 # double-buffer slot; chain restarts at j == 0
    row0 = b * tb

    def issue(jj, slot_):
        col0 = jj * tn           # hoisted out of the per-row body
        for r in range(tb):      # static unroll over the 8 batch rows
            def one(c, carry):
                rid = ids_ref[row0 + r, col0 + c]
                pltpu.make_async_copy(
                    ent_ref.at[pl.ds(rid, 1)],
                    gbuf.at[slot_, r, pl.ds(c, 1)],
                    sem.at[slot_],
                ).start()
                return carry
            # unroll keeps the DMA-descriptor (vector-misc) slot fed and cuts
            # scalar loop-control pressure ~8x on the issue phase.
            lax.fori_loop(0, tn, one, 0, unroll=8)

    # Cold start of this 8-row batch block: gather tile 0 into slot 0.
    # TODO(synk): prefetch tile 0 of the NEXT batch block at j == nt-1 to hide
    # this stall (needs per-core last-block guards once the batch axis is
    # split across v7x's two TensorCores).
    @pl.when(j == 0)
    def _():
        issue(0, 0)

    # Prefetch the next tile of the same batch block into the other slot so
    # its gather DMAs overlap with this tile's wait + compute + store.
    @pl.when(j + 1 < nt)
    def _():
        issue(j + 1, 1 - slot)

    # ONE aggregate wait: every per-row gather of this tile signals sem[slot]
    # with its byte count; this descriptor (the whole slot buffer, tb*tn rows)
    # matches the total, so a single wait covers all of them.
    pltpu.make_async_copy(gbuf.at[slot], gbuf.at[slot], sem.at[slot]).wait()

    g = gbuf[slot].astype(jnp.float32)                     # (tb, tn, Dp)
    base = base_ref[...].astype(jnp.float32)[:, None, :]   # (tb, 1, Dp)
    if head_batch:
        s = g + base                       # head + (relation - tail)
    else:
        s = base - g                       # (head + relation) - tail
    out_ref[...] = gamma - jnp.sum(jnp.abs(s), axis=-1)    # (tb, tn), lane-dense


def transe_neg_score(base, ent_table, neg_ids, gamma, head_batch):
    """base: (B, Dp) f32, ent_table: (E, Dp), neg_ids: (B, N) int -> (B, N)."""
    B, Dp = base.shape
    _, N = neg_ids.shape
    tb = _TB_NEG
    esize = jnp.dtype(ent_table.dtype).itemsize

    # TODO(synk): add a VMEM-resident fast path (full-table VMEM BlockSpec +
    # in-kernel gather) for small KGs where nentity*Dp*esize fits the
    # per-generation VMEM budget; it would remove all per-row DMA descriptors.

    # Negative tile: lane-dense and as large as the gather double-buffer
    # allows (2 slots x tb rows x TN x Dp x esize <= ~16 MiB -> fits v7x too).
    gbuf_budget = 16 * 1024 * 1024
    tn_cap = max(128, (gbuf_budget // (2 * tb * Dp * esize)) // 128 * 128)
    TN = int(min(512, _round_up(N, 128), tn_cap))
    Npad = _round_up(N, TN)
    NT = Npad // TN

    Bp = _round_up(B, tb)
    base = base.astype(jnp.float32)
    if Bp != B:
        base = jnp.pad(base, ((0, Bp - B), (0, 0)))
    ids = neg_ids.astype(jnp.int32)
    if Npad != N or Bp != B:
        # Padded ids are 0 (always a valid entity); padded rows/columns are
        # computed then sliced off. TODO(synk): skip the wasted gather DMAs on
        # the final partial tile.
        ids = jnp.pad(ids, ((0, Bp - B), (0, Npad - N)))

    kernel = functools.partial(
        _neg_kernel, head_batch=head_batch, gamma=float(gamma), tn=TN, tb=tb)

    def one_call(base_c, ids_c):
        rows = base_c.shape[0]
        grid_spec = pltpu.PrefetchScalarGridSpec(
            num_scalar_prefetch=1,
            grid=(rows // tb, NT),
            in_specs=[
                # base block independent of j -> stays resident per row-block.
                pl.BlockSpec((tb, Dp), lambda b, j, ids_s: (b, 0)),
                pl.BlockSpec(memory_space=pl.ANY),   # entity table stays in HBM
            ],
            out_specs=pl.BlockSpec((tb, TN), lambda b, j, ids_s: (b, j)),
            scratch_shapes=[
                pltpu.VMEM((2, tb, TN, Dp), ent_table.dtype),
                pltpu.SemaphoreType.DMA((2,)),
            ],
        )
        return pl.pallas_call(
            kernel,
            out_shape=jax.ShapeDtypeStruct((rows, Npad), jnp.float32),
            grid_spec=grid_spec,
            compiler_params=pltpu.CompilerParams(
                # batch-block axis can shard across TensorCores (v7x); the
                # negative-tile axis must stay 'arbitrary' because of the
                # cross-step gather prefetch chain.
                dimension_semantics=("parallel", "arbitrary"),
                vmem_limit_bytes=32 * 1024 * 1024,
            ),
        )(ids_c, base_c, ent_table)

    # Bound the SMEM footprint of the scalar-prefetched id table (4 B per id)
    # by splitting very large batches across multiple pallas_calls.
    ids_smem_budget = 512 * 1024
    rows_cap = max(tb, (ids_smem_budget // (4 * Npad)) // tb * tb)
    if Bp <= rows_cap:
        out = one_call(base, ids)
    else:
        out = jnp.concatenate(
            [one_call(base[i:i + rows_cap], ids[i:i + rows_cap])
             for i in range(0, Bp, rows_cap)],
            axis=0)
    return out[:B, :N]


# --------------------------------------------------------------------------- #
# KGEModel (TransE scoring path), JAX/Pallas side.
# --------------------------------------------------------------------------- #
class KGEModelJAX:
    def __init__(self, model_name, nentity, nrelation, hidden_dim, gamma,
                 double_entity_embedding=False, double_relation_embedding=False,
                 seed=0, embedding_dtype=jnp.bfloat16):
        if model_name not in ['TransE', 'DistMult', 'ComplEx', 'RotatE',
                              'pRotatE', 'TransD']:
            raise ValueError('model %s not supported' % model_name)
        self.model_name = model_name
        self.nentity = nentity
        self.nrelation = nrelation
        self.hidden_dim = hidden_dim
        self.epsilon = 2.0
        self.gamma = float(gamma)
        self.embedding_range = (self.gamma + self.epsilon) / hidden_dim
        self.entity_dim = hidden_dim * 2 if double_entity_embedding else hidden_dim
        self.relation_dim = hidden_dim * 2 if double_relation_embedding else hidden_dim

        # Pad the hidden dim to a lane-aligned multiple of 128; zero pad lanes
        # contribute 0 to the L1 sum so the scores are unchanged.
        self.padded_entity_dim = _round_up(self.entity_dim, 128)
        self.padded_relation_dim = _round_up(self.relation_dim, 128)

        key = jax.random.PRNGKey(seed)
        k_ent, k_rel = jax.random.split(key)
        ent = jax.random.uniform(k_ent, (nentity, self.entity_dim), jnp.float32,
                                 -self.embedding_range, self.embedding_range)
        rel = jax.random.uniform(k_rel, (nrelation, self.relation_dim), jnp.float32,
                                 -self.embedding_range, self.embedding_range)
        ent = jnp.pad(ent, ((0, 0), (0, self.padded_entity_dim - self.entity_dim)))
        rel = jnp.pad(rel, ((0, 0), (0, self.padded_relation_dim - self.relation_dim)))
        # bf16 storage halves HBM traffic; all arithmetic is done in f32.
        # (Note: vs. a true f32 PyTorch model this deviates by O(1e-2) at large
        # hidden_dim; pass embedding_dtype=jnp.float32 for exact-storage mode.)
        self.entity_embedding = ent.astype(embedding_dtype)
        self.relation_embedding = rel.astype(embedding_dtype)

    def forward(self, sample, mode='single'):
        if self.model_name != 'TransE':
            # Only the TransE scoring path exists in the reference forward.
            raise ValueError('model %s not supported' % self.model_name)
        ent = self.entity_embedding
        rel = self.relation_embedding

        if mode in ('single', 'nscaching_batch'):
            # Small B-row gathers stay in XLA; the kernel blocks TB batch rows
            # per grid step so the N==1 path isn't per-row overhead.
            h = jnp.take(ent, sample[:, 0].astype(jnp.int32), axis=0)
            r = jnp.take(rel, sample[:, 1].astype(jnp.int32), axis=0)
            t = jnp.take(ent, sample[:, 2].astype(jnp.int32), axis=0)
            return transe_single_score(h, r, t, self.gamma)
        elif mode == 'head-batch':
            tail_part, head_part = sample
            r = jnp.take(rel, tail_part[:, 1].astype(jnp.int32), axis=0).astype(jnp.float32)
            t = jnp.take(ent, tail_part[:, 2].astype(jnp.int32), axis=0).astype(jnp.float32)
            base = r - t                       # score = head_neg + (r - t)
            return transe_neg_score(base, ent, head_part, self.gamma, head_batch=True)
        elif mode == 'tail-batch':
            head_part, tail_part = sample
            h = jnp.take(ent, head_part[:, 0].astype(jnp.int32), axis=0).astype(jnp.float32)
            r = jnp.take(rel, head_part[:, 1].astype(jnp.int32), axis=0).astype(jnp.float32)
            base = h + r                       # score = (h + r) - tail_neg
            return transe_neg_score(base, ent, tail_part, self.gamma, head_batch=False)
        else:
            raise ValueError('mode %s not supported' % mode)

    __call__ = forward


if __name__ == "__main__":
    nentity, nrelation, hidden_dim, gamma = 50, 7, 32, 12.0
    B, Nneg = 5, 1024    # Nneg = 2 * TN so the negative axis really tiles (NT=2)

    model = KGEModelJAX("TransE", nentity, nrelation, hidden_dim, gamma, seed=0)

    key = jax.random.PRNGKey(0)
    k1, k2, k3, k4 = jax.random.split(key, 4)
    pos_sample = jnp.stack(
        [
            jax.random.randint(k1, (B,), 0, nentity),
            jax.random.randint(k2, (B,), 0, nrelation),
            jax.random.randint(k3, (B,), 0, nentity),
        ],
        axis=1,
    ).astype(jnp.int32)                                        # (B, 3)
    neg_sample = jax.random.randint(k4, (B, Nneg), 0, nentity).astype(jnp.int32)

    score_single = jax.block_until_ready(model(pos_sample, mode="single"))
    score_tail = jax.block_until_ready(
        model((pos_sample, neg_sample), mode="tail-batch"))
    score_head = jax.block_until_ready(
        model((pos_sample, neg_sample), mode="head-batch"))

    # Pure-JAX reference (same bf16-stored / f32-compute semantics).
    ent32 = model.entity_embedding.astype(jnp.float32)
    rel32 = model.relation_embedding.astype(jnp.float32)
    h = ent32[pos_sample[:, 0]]
    r = rel32[pos_sample[:, 1]]
    t = ent32[pos_sample[:, 2]]
    ref_single = gamma - jnp.sum(jnp.abs(h + r - t), axis=-1, keepdims=True)
    t_neg = ent32[neg_sample]
    ref_tail = gamma - jnp.sum(jnp.abs((h + r)[:, None, :] - t_neg), axis=-1)
    h_neg = ent32[neg_sample]
    ref_head = gamma - jnp.sum(jnp.abs(h_neg + (r - t)[:, None, :]), axis=-1)

    assert score_single.shape == (B, 1)
    assert score_tail.shape == (B, Nneg)
    assert score_head.shape == (B, Nneg)
    assert jnp.allclose(score_single, ref_single, atol=2e-3, rtol=1e-3), \
        float(jnp.max(jnp.abs(score_single - ref_single)))
    assert jnp.allclose(score_tail, ref_tail, atol=2e-3, rtol=1e-3), \
        float(jnp.max(jnp.abs(score_tail - ref_tail)))
    assert jnp.allclose(score_head, ref_head, atol=2e-3, rtol=1e-3), \
        float(jnp.max(jnp.abs(score_head - ref_head)))

    print("KERNEL_OK")
</pallas_src>

<mosaic_0001>
module attributes {stable_mosaic.version = 11 : i64} {
  func.func @_single_kernel(%arg0: i32, %arg1: memref<8x128xbf16, #tpu.memory_space<vmem>>, %arg2: memref<8x128xbf16, #tpu.memory_space<vmem>>, %arg3: memref<8x128xbf16, #tpu.memory_space<vmem>>, %arg4: memref<8x1xf32, #tpu.memory_space<vmem>>) attributes {dimension_semantics = [#tpu.dimension_semantics<parallel>], iteration_bounds = array<i64: 1>, scalar_prefetch = 0 : i64, scratch_operands = 0 : i64, tpu.core_type = #tpu.core_type<tc>, window_params = [{transform_indices = @transform_0, window_bounds = array<i64: 8, 128>}, {transform_indices = @transform_1, window_bounds = array<i64: 8, 128>}, {transform_indices = @transform_2, window_bounds = array<i64: 8, 128>}, {transform_indices = @transform_3, window_bounds = array<i64: 8, 1>}]} {
    %c0 = arith.constant 0 : index
    %c0_0 = arith.constant 0 : index
    %0 = vector.load %arg1[%c0, %c0_0] : memref<8x128xbf16, #tpu.memory_space<vmem>>, vector<8x128xbf16>
    %1 = arith.extf %0 : vector<8x128xbf16> to vector<8x128xf32>
    %c0_1 = arith.constant 0 : index
    %c0_2 = arith.constant 0 : index
    %2 = vector.load %arg2[%c0_1, %c0_2] : memref<8x128xbf16, #tpu.memory_space<vmem>>, vector<8x128xbf16>
    %3 = arith.extf %2 : vector<8x128xbf16> to vector<8x128xf32>
    %c0_3 = arith.constant 0 : index
    %c0_4 = arith.constant 0 : index
    %4 = vector.load %arg3[%c0_3, %c0_4] : memref<8x128xbf16, #tpu.memory_space<vmem>>, vector<8x128xbf16>
    %5 = arith.extf %4 : vector<8x128xbf16> to vector<8x128xf32>
    %6 = arith.addf %1, %3 : vector<8x128xf32>
    %7 = arith.subf %6, %5 : vector<8x128xf32>
    %8 = math.absf %7 : vector<8x128xf32>
    %cst = arith.constant dense<0.000000e+00> : vector<8xf32>
    %9 = vector.multi_reduction <add>, %8, %cst [1] : vector<8x128xf32> to vector<8xf32>
    %10 = vector.shape_cast %9 : vector<8xf32> to vector<8x1xf32>
    %cst_5 = arith.constant 1.200000e+01 : f32
    %11 = vector.broadcast %cst_5 : f32 to vector<8x1xf32>
    %12 = arith.subf %11, %10 : vector<8x1xf32>
    %c0_6 = arith.constant 0 : index
    %c0_7 = arith.constant 0 : index
    %13 = vector.load %arg4[%c0_6, %c0_7] : memref<8x1xf32, #tpu.memory_space<vmem>>, vector<8x1xf32>
    tpu.vector_store %arg4[%c0_6, %c0_7], %12 {strides = array<i32>} : memref<8x1xf32, #tpu.memory_space<vmem>>, vector<8x1xf32>,
    return
  }
  func.func @transform_0(%arg0: i32) -> (i32, i32) {
    %c0_i32 = arith.constant 0 : i32
    %c0_i32_0 = arith.constant 0 : i32
    return %arg0, %c0_i32 : i32, i32
  }
  func.func @transform_1(%arg0: i32) -> (i32, i32) {
    %c0_i32 = arith.constant 0 : i32
    %c0_i32_0 = arith.constant 0 : i32
    return %arg0, %c0_i32 : i32, i32
  }
  func.func @transform_2(%arg0: i32) -> (i32, i32) {
    %c0_i32 = arith.constant 0 : i32
    %c0_i32_0 = arith.constant 0 : i32
    return %arg0, %c0_i32 : i32, i32
  }
  func.func @transform_3(%arg0: i32) -> (i32, i32) {
    %c0_i32 = arith.constant 0 : i32
    %c0_i32_0 = arith.constant 0 : i32
    return %arg0, %c0_i32 : i32, i32
  }
}

</mosaic_0001>

<llo_original>
// kernel: tpu_custom_call.1
$region0: #{tpu_custom_call.1}
  #allocation0 [shape = 'u32[]', space=smem, size = 0x4, offset = 0x4, fixed_abs, tag = 'smem constant byte address 0x4 - core index']
  #allocation1 [shape = 'u32[144,128]{1,0:T(1,128)}', space=vmem, size = 0x12000, scoped, tag = 'internal scratch']
  %s0 = inlined_call_operand.hbm [shape: bf16[8,128], index: 0, kind: input, shape index: {}]
  %s1 = inlined_call_operand.hbm [shape: bf16[8,128], index: 1, kind: input, shape index: {}]
  %s2 = inlined_call_operand.hbm [shape: bf16[8,128], index: 2, kind: input, shape index: {}]
  %s3 = inlined_call_operand.vmem [shape: f32[8,1], index: 3, kind: output, shape index: {}]
  %s4 = sld [smem:[#allocation0]]
  $region34: #{tpu_custom_call.1} parent=0
    _
  %s6 = ssub.s32 1, %s4
  %s7 = scalar_select 0, %s6, %s4
  $region1: #{tpu_custom_call.1} parent=0
    #allocation2 [shape = 'u8[2048]{0}', space=vmem, size = 0x800, scoped, tag = 'input window, operand 0, single buffered']
    #allocation3 [shape = 's32[1]{0}', space=sflag, size = 0x4, scoped, tag = 'scoped memory for tpu_custom_call.1']
    #allocation4 [shape = 'u8[2048]{0}', space=vmem, size = 0x800, scoped, tag = 'input window, operand 1, single buffered']
    #allocation5 [shape = 's32[1]{0}', space=sflag, size = 0x4, scoped, tag = 'scoped memory for tpu_custom_call.1']
    #allocation6 [shape = 'u8[2048]{0}', space=vmem, size = 0x800, scoped, tag = 'input window, operand 2, single buffered']
    %8 = vsyncpa [#allocation3], 0
    %9 = vsyncpa [#allocation5], 0
    // Predicated region
    $region2: #{tpu_custom_call.1} parent=1 // pred_check
      _
    $region3: #{tpu_custom_call.1} parent=1 // pred_check_branch
      %11 = sbr.rel (0) target = $region5
    $region4: #{tpu_custom_call.1} parent=1 // pred_region
      %s13 = ssub.s32 64, 64
      %14 = vsyncadd [#allocation3], %s13
      %s16 = sshll.u32 [#allocation2], 4
      %s17 = int_to_ptr.vmem [resolvable:$true] %s16
      %19 = dma.hbm_to_vmem [thread:$0]  %s0, 64, %s17, [#allocation3]
    $region5: #{tpu_custom_call.1} parent=1 // pred_fallthru
      _
    // Predicated region
    $region6: #{tpu_custom_call.1} parent=1 // pred_check
      _
    $region7: #{tpu_custom_call.1} parent=1 // pred_check_branch
      %21 = sbr.rel (0) target = $region9
    $region8: #{tpu_custom_call.1} parent=1 // pred_region
      %s23 = ssub.s32 64, 64
      %24 = vsyncadd [#allocation5], %s23
      %s26 = sshll.u32 [#allocation4], 4
      %s27 = int_to_ptr.vmem [resolvable:$true] %s26
      %29 = dma.hbm_to_vmem [thread:$0]  %s1, 64, %s27, [#allocation5]
    $region9: #{tpu_custom_call.1} parent=1 // pred_fallthru
      _
    // Predicated region
    $region10: #{tpu_custom_call.1} parent=1 // pred_check
      _
    $region11: #{tpu_custom_call.1} parent=1 // pred_check_branch
      %31 = sbr.rel (0) target = $region13
    $region12: #{tpu_custom_call.1} parent=1 // pred_region
      %s33 = ssub.s32 64, 64
      %34 = vsyncadd [#allocation5], %s33
      %s36 = sshll.u32 [#allocation6], 4
      %s37 = int_to_ptr.vmem [resolvable:$true] %s36
      %39 = dma.hbm_to_vmem [thread:$0]  %s2, 64, %s37, [#allocation5]
    $region13: #{tpu_custom_call.1} parent=1 // pred_fallthru
      _
    // Predicated region
    $region14: #{tpu_custom_call.1} parent=1 // pred_check
      _
    $region15: #{tpu_custom_call.1} parent=1 // pred_check_branch
      %41 = sbr.rel (0) target = $region17
    $region16: #{tpu_custom_call.1} parent=1 // pred_region
      %42 = dma.done [#allocation3], 64
    $region17: #{tpu_custom_call.1} parent=1 // pred_fallthru
      _
    // Predicated region
    $region18: #{tpu_custom_call.1} parent=1 // pred_check
      _
    $region19: #{tpu_custom_call.1} parent=1 // pred_check_branch
      %44 = sbr.rel (0) target = $region21
    $region20: #{tpu_custom_call.1} parent=1 // pred_region
      %45 = dma.done [#allocation5], 64
    $region21: #{tpu_custom_call.1} parent=1 // pred_fallthru
      _
    // Predicated region
    $region22: #{tpu_custom_call.1} parent=1 // pred_check
      _
    $region23: #{tpu_custom_call.1} parent=1 // pred_check_branch
      %47 = sbr.rel (0) target = $region25
    $region24: #{tpu_custom_call.1} parent=1 // pred_region
      %48 = dma.done [#allocation5], 64
    $region25: #{tpu_custom_call.1} parent=1 // pred_fallthru
      _
    %v49 = vld [vmem:[#allocation2] sm:$0xf]
    %v50 = vunpack.c.l.bf16 %v49
    %v51 = vld [vmem:[#allocation4] sm:$0xf]
    %v52 = vunpack.c.l.bf16 %v51
    %v53 = vld [vmem:[#allocation6] sm:$0xf]
    %v54 = vunpack.c.l.bf16 %v53
    %v55 = vadd.f32 %v50, %v52
    %v56 = vsub.f32 %v55, %v54
    %v57 = vand.u32 2147483647, %v56
    %58 = vadd.xlane.f32.xlu0 %v57
    %v59 = vpop.xlane.xlu0 %58
    %v60 = vsub.f32 12.0, %v59
    %vm61 = vcmask 7168
    %62 = vst.msk [vmem:[%s3] sm:$0xff] %vm61, %v60
    // Predicated region
    $region26: #{tpu_custom_call.1} parent=1 // pred_check
      _
    $region27: #{tpu_custom_call.1} parent=1 // pred_check_branch
      %64 = sbr.rel (0) target = $region29
    $region28: #{tpu_custom_call.1} parent=1 // pred_region
      _
    $region29: #{tpu_custom_call.1} parent=1 // pred_fallthru
      _
    // Predicated region
    $region30: #{tpu_custom_call.1} parent=1 // pred_check
      _
    $region31: #{tpu_custom_call.1} parent=1 // pred_check_branch
      %66 = sbr.rel (0) target = $region33
    $region32: #{tpu_custom_call.1} parent=1 // pred_region
      _
    $region33: #{tpu_custom_call.1} parent=1 // pred_fallthru
      _
    %67 = vsyncpa [#allocation3], 1
    %68 = vsyncpa [#allocation5], 1

</llo_original>
